<compile_context>
chip_gen: v7x
topology: tpu7x:2x2x1
jax: 0.10.0
libtpu: 0.0.40
codegen_flags: <defaults>
</compile_context>

<pallas_src>
import jax
import jax.numpy as jnp
from jax.experimental import pallas as pl
from jax.experimental.pallas import tpu as pltpu


def _round_up(n, m):
    return ((n + m - 1) // m) * m


def posterior_kernel(x_ref, w1_ref, b1_ref, w2_ref, b2_ref, w3_ref, b3_ref, o_ref):
    cdt = w1_ref.dtype  # MXU operand dtype (f32 default, bf16 optional knob)
    # affine1 + relu
    h = jnp.dot(x_ref[...].astype(cdt), w1_ref[...],
                preferred_element_type=jnp.float32) + b1_ref[...]
    h = jnp.maximum(h, 0.0)
    # affine2 + relu
    h = jnp.dot(h.astype(cdt), w2_ref[...],
                preferred_element_type=jnp.float32) + b2_ref[...]
    h = jnp.maximum(h, 0.0)
    # fused narrow heads: [affine31 | affine32], padded only to a multiple of 8
    out = jnp.dot(h.astype(cdt), w3_ref[...],
                  preferred_element_type=jnp.float32) + b3_ref[...]
    o_ref[...] = out.astype(o_ref.dtype)


def posterior_forward(x, packed, output_size, tm=1024):
    """x: [B, input_size] f32.  packed: dict from pack_params().
    Returns (mean_head, second_head), each [B, output_size] f32."""
    w1, b1, w2, b2, w3, b3 = (packed[k] for k in ("w1", "b1", "w2", "b2", "w3", "b3"))
    B, in_size = x.shape
    H = w1.shape[1]        # hidden, rounded to a multiple of 8 (NOT 128)
    head = w3.shape[1]     # fused head width, rounded to a multiple of 8

    # Batch tile: multiple of 8, capped at ~ceil(B/2) so the grid has >=2
    # tiles whenever B > 8 (keeps v7x's second TensorCore busy).
    tm = max(8, min(tm, _round_up(pl.cdiv(B, 2), 8)))
    Bp = _round_up(B, tm)
    if Bp != B:
        x = jnp.pad(x, ((0, Bp - B), (0, 0)))

    grid = (Bp // tm,)
    xb = x.dtype.itemsize
    wb = w1.dtype.itemsize
    flops = 2 * Bp * (in_size * H + H * H + H * head)
    bytes_accessed = (xb * Bp * in_size + 4 * Bp * head
                      + wb * (in_size * H + H * H + H * head)
                      + 4 * (2 * H + head))

    out = pl.pallas_call(
        posterior_kernel,
        out_shape=jax.ShapeDtypeStruct((Bp, head), jnp.float32),
        grid_spec=pltpu.PrefetchScalarGridSpec(
            num_scalar_prefetch=0,
            grid=grid,
            in_specs=[
                pl.BlockSpec((tm, in_size), lambda i: (i, 0)),   # x: tiled over batch
                pl.BlockSpec((in_size, H), lambda i: (0, 0)),    # W1: VMEM-resident
                pl.BlockSpec((1, H),       lambda i: (0, 0)),    # b1
                pl.BlockSpec((H, H),       lambda i: (0, 0)),    # W2
                pl.BlockSpec((1, H),       lambda i: (0, 0)),    # b2
                pl.BlockSpec((H, head),    lambda i: (0, 0)),    # fused W3 (narrow)
                pl.BlockSpec((1, head),    lambda i: (0, 0)),    # fused b3
            ],
            out_specs=pl.BlockSpec((tm, head), lambda i: (i, 0)),
        ),
        compiler_params=pltpu.CompilerParams(
            dimension_semantics=("parallel",),
            vmem_limit_bytes=32 * 1024 * 1024),
        cost_estimate=pl.CostEstimate(
            flops=flops, transcendentals=0, bytes_accessed=bytes_accessed),
    )(x, w1, b1, w2, b2, w3, b3)

    # One contiguous slice of the narrow padded head, then split the two heads.
    out = out[:B, :2 * output_size]
    return out[:, :output_size], out[:, output_size:]


def init_params(key, input_size=12, hidden_size=64, output_size=1):
    """Raw params mirroring nn.Linear default init (uniform +/- 1/sqrt(fan_in)).
    Weights are stored pre-transposed as [in, out]."""
    ks = jax.random.split(key, 8)

    def linear(kw, kb, fan_in, fan_out):
        bound = 1.0 / float(fan_in) ** 0.5
        w = jax.random.uniform(kw, (fan_in, fan_out), jnp.float32, -bound, bound)
        b = jax.random.uniform(kb, (1, fan_out), jnp.float32, -bound, bound)
        return w, b

    w1, b1 = linear(ks[0], ks[1], input_size, hidden_size)
    w2, b2 = linear(ks[2], ks[3], hidden_size, hidden_size)
    w31, b31 = linear(ks[4], ks[5], hidden_size, output_size)
    w32, b32 = linear(ks[6], ks[7], hidden_size, output_size)
    return {"w1": w1, "b1": b1, "w2": w2, "b2": b2,
            "w31": w31, "b31": b31, "w32": w32, "b32": b32}


def pack_params(raw, output_size, compute_dtype=jnp.float32):
    """Zero-pad hidden/head only to a multiple of 8 (sublane alignment) and
    fuse the two 1-wide heads into one narrow slab.  relu(0)=0 with zero
    padding keeps results bit-identical.  compute_dtype=jnp.bfloat16 is an
    optional perf knob (native MXU dtype); it relaxes accuracy to ~1e-3 rel."""
    in_size, hidden = raw["w1"].shape
    H = _round_up(hidden, 8)
    head = _round_up(2 * output_size, 8)

    w1 = jnp.zeros((in_size, H), jnp.float32).at[:, :hidden].set(raw["w1"])
    b1 = jnp.zeros((1, H), jnp.float32).at[:, :hidden].set(raw["b1"])
    w2 = jnp.zeros((H, H), jnp.float32).at[:hidden, :hidden].set(raw["w2"])
    b2 = jnp.zeros((1, H), jnp.float32).at[:, :hidden].set(raw["b2"])
    w3 = jnp.zeros((H, head), jnp.float32)
    w3 = w3.at[:hidden, :output_size].set(raw["w31"])
    w3 = w3.at[:hidden, output_size:2 * output_size].set(raw["w32"])
    b3 = jnp.zeros((1, head), jnp.float32)
    b3 = b3.at[:, :output_size].set(raw["b31"])
    b3 = b3.at[:, output_size:2 * output_size].set(raw["b32"])
    # Biases stay f32 (added to the f32 MXU accumulator); only operands cast.
    return {"w1": w1.astype(compute_dtype), "b1": b1,
            "w2": w2.astype(compute_dtype), "b2": b2,
            "w3": w3.astype(compute_dtype), "b3": b3}


if __name__ == "__main__":
    key = jax.random.PRNGKey(0)
    k_param, k_x, k_x2 = jax.random.split(key, 3)

    input_size, hidden_size, output_size, batch = 12, 64, 1, 8
    raw = init_params(k_param, input_size, hidden_size, output_size)
    packed = pack_params(raw, output_size)  # f32 operands -> 1e-5 parity

    def ref_forward(xx):
        h1 = jnp.maximum(xx @ raw["w1"] + raw["b1"], 0.0)
        h2 = jnp.maximum(h1 @ raw["w2"] + raw["b2"], 0.0)
        return h2 @ raw["w31"] + raw["b31"], h2 @ raw["w32"] + raw["b32"]

    # Small-shape run (single tile).
    x = jax.random.normal(k_x, (batch, input_size), jnp.float32)
    out1, out2 = jax.block_until_ready(posterior_forward(x, packed, output_size))
    ref1, ref2 = ref_forward(x)
    assert out1.shape == (batch, output_size)
    assert out2.shape == (batch, output_size)
    assert jnp.allclose(out1, ref1, atol=1e-5, rtol=1e-5)
    assert jnp.allclose(out2, ref2, atol=1e-5, rtol=1e-5)

    # Multi-tile + batch-padding path (grid of 2, padded rows sliced off).
    x2 = jax.random.normal(k_x2, (200, input_size), jnp.float32)
    o1, o2 = jax.block_until_ready(posterior_forward(x2, packed, output_size))
    r1, r2 = ref_forward(x2)
    assert jnp.allclose(o1, r1, atol=1e-5, rtol=1e-5)
    assert jnp.allclose(o2, r2, atol=1e-5, rtol=1e-5)

    print("KERNEL_OK")
</pallas_src>

<mosaic_0001>
module attributes {stable_mosaic.version = 11 : i64} {
  func.func @posterior_kernel(%arg0: i32, %arg1: memref<8x12xf32, #tpu.memory_space<vmem>>, %arg2: memref<12x64xf32, #tpu.memory_space<vmem>>, %arg3: memref<1x64xf32, #tpu.memory_space<vmem>>, %arg4: memref<64x64xf32, #tpu.memory_space<vmem>>, %arg5: memref<1x64xf32, #tpu.memory_space<vmem>>, %arg6: memref<64x8xf32, #tpu.memory_space<vmem>>, %arg7: memref<1x8xf32, #tpu.memory_space<vmem>>, %arg8: memref<8x8xf32, #tpu.memory_space<vmem>>) attributes {dimension_semantics = [#tpu.dimension_semantics<parallel>], iteration_bounds = array<i64: 1>, scalar_prefetch = 0 : i64, scratch_operands = 0 : i64, tpu.core_type = #tpu.core_type<tc>, window_params = [{transform_indices = @transform_0, window_bounds = array<i64: 8, 12>}, {pipeline_mode = #tpu.pipeline_mode<synchronous>, transform_indices = @transform_1, window_bounds = array<i64: 12, 64>}, {pipeline_mode = #tpu.pipeline_mode<synchronous>, transform_indices = @transform_2, window_bounds = array<i64: 1, 64>}, {pipeline_mode = #tpu.pipeline_mode<synchronous>, transform_indices = @transform_3, window_bounds = array<i64: 64, 64>}, {pipeline_mode = #tpu.pipeline_mode<synchronous>, transform_indices = @transform_4, window_bounds = array<i64: 1, 64>}, {pipeline_mode = #tpu.pipeline_mode<synchronous>, transform_indices = @transform_5, window_bounds = array<i64: 64, 8>}, {pipeline_mode = #tpu.pipeline_mode<synchronous>, transform_indices = @transform_6, window_bounds = array<i64: 1, 8>}, {transform_indices = @transform_7, window_bounds = array<i64: 8, 8>}]} {
    %c0 = arith.constant 0 : index
    %c0_0 = arith.constant 0 : index
    %0 = vector.load %arg1[%c0, %c0_0] : memref<8x12xf32, #tpu.memory_space<vmem>>, vector<8x12xf32>
    %c0_1 = arith.constant 0 : index
    %c0_2 = arith.constant 0 : index
    %1 = vector.load %arg2[%c0_1, %c0_2] : memref<12x64xf32, #tpu.memory_space<vmem>>, vector<12x64xf32>
    %cst = arith.constant dense<0.000000e+00> : vector<8x64xf32>
    %2 = tpu.matmul %0, %1, %cst {dimension_numbers = #tpu.dot_dimension_numbers<[1], [0], [0], [1], [0, 0, 1, 1], [], []>} : vector<8x12xf32>, vector<12x64xf32>, vector<8x64xf32> -> vector<8x64xf32>
    %c0_3 = arith.constant 0 : index
    %c0_4 = arith.constant 0 : index
    %3 = vector.load %arg3[%c0_3, %c0_4] : memref<1x64xf32, #tpu.memory_space<vmem>>, vector<1x64xf32>
    %4 = vector.broadcast %3 : vector<1x64xf32> to vector<8x64xf32>
    %5 = arith.addf %2, %4 : vector<8x64xf32>
    %cst_5 = arith.constant 0.000000e+00 : f32
    %6 = vector.broadcast %cst_5 : f32 to vector<8x64xf32>
    %7 = arith.maximumf %5, %6 : vector<8x64xf32>
    %c0_6 = arith.constant 0 : index
    %c0_7 = arith.constant 0 : index
    %8 = vector.load %arg4[%c0_6, %c0_7] : memref<64x64xf32, #tpu.memory_space<vmem>>, vector<64x64xf32>
    %cst_8 = arith.constant dense<0.000000e+00> : vector<8x64xf32>
    %9 = tpu.matmul %7, %8, %cst_8 {dimension_numbers = #tpu.dot_dimension_numbers<[1], [0], [0], [1], [0, 0, 1, 1], [], []>} : vector<8x64xf32>, vector<64x64xf32>, vector<8x64xf32> -> vector<8x64xf32>
    %c0_9 = arith.constant 0 : index
    %c0_10 = arith.constant 0 : index
    %10 = vector.load %arg5[%c0_9, %c0_10] : memref<1x64xf32, #tpu.memory_space<vmem>>, vector<1x64xf32>
    %11 = vector.broadcast %10 : vector<1x64xf32> to vector<8x64xf32>
    %12 = arith.addf %9, %11 : vector<8x64xf32>
    %cst_11 = arith.constant 0.000000e+00 : f32
    %13 = vector.broadcast %cst_11 : f32 to vector<8x64xf32>
    %14 = arith.maximumf %12, %13 : vector<8x64xf32>
    %c0_12 = arith.constant 0 : index
    %c0_13 = arith.constant 0 : index
    %15 = vector.load %arg6[%c0_12, %c0_13] : memref<64x8xf32, #tpu.memory_space<vmem>>, vector<64x8xf32>
    %cst_14 = arith.constant dense<0.000000e+00> : vector<8x8xf32>
    %16 = tpu.matmul %14, %15, %cst_14 {dimension_numbers = #tpu.dot_dimension_numbers<[1], [0], [0], [1], [0, 0, 1, 1], [], []>} : vector<8x64xf32>, vector<64x8xf32>, vector<8x8xf32> -> vector<8x8xf32>
    %c0_15 = arith.constant 0 : index
    %c0_16 = arith.constant 0 : index
    %17 = vector.load %arg7[%c0_15, %c0_16] : memref<1x8xf32, #tpu.memory_space<vmem>>, vector<1x8xf32>
    %18 = vector.broadcast %17 : vector<1x8xf32> to vector<8x8xf32>
    %19 = arith.addf %16, %18 : vector<8x8xf32>
    %c0_17 = arith.constant 0 : index
    %c0_18 = arith.constant 0 : index
    %20 = vector.load %arg8[%c0_17, %c0_18] : memref<8x8xf32, #tpu.memory_space<vmem>>, vector<8x8xf32>
    tpu.vector_store %arg8[%c0_17, %c0_18], %19 {strides = array<i32>} : memref<8x8xf32, #tpu.memory_space<vmem>>, vector<8x8xf32>,
    return
  }
  func.func @transform_0(%arg0: i32) -> (i32, i32) {
    %c0_i32 = arith.constant 0 : i32
    %c0_i32_0 = arith.constant 0 : i32
    return %arg0, %c0_i32 : i32, i32
  }
  func.func @transform_1(%arg0: i32) -> (i32, i32) {
    %c0_i32 = arith.constant 0 : i32
    %c0_i32_0 = arith.constant 0 : i32
    %c0_i32_1 = arith.constant 0 : i32
    return %c0_i32, %c0_i32_0 : i32, i32
  }
  func.func @transform_2(%arg0: i32) -> (i32, i32) {
    %c0_i32 = arith.constant 0 : i32
    %c0_i32_0 = arith.constant 0 : i32
    %c0_i32_1 = arith.constant 0 : i32
    return %c0_i32, %c0_i32_0 : i32, i32
  }
  func.func @transform_3(%arg0: i32) -> (i32, i32) {
    %c0_i32 = arith.constant 0 : i32
    %c0_i32_0 = arith.constant 0 : i32
    %c0_i32_1 = arith.constant 0 : i32
    return %c0_i32, %c0_i32_0 : i32, i32
  }
  func.func @transform_4(%arg0: i32) -> (i32, i32) {
    %c0_i32 = arith.constant 0 : i32
    %c0_i32_0 = arith.constant 0 : i32
    %c0_i32_1 = arith.constant 0 : i32
    return %c0_i32, %c0_i32_0 : i32, i32
  }
  func.func @transform_5(%arg0: i32) -> (i32, i32) {
    %c0_i32 = arith.constant 0 : i32
    %c0_i32_0 = arith.constant 0 : i32
    %c0_i32_1 = arith.constant 0 : i32
    return %c0_i32, %c0_i32_0 : i32, i32
  }
  func.func @transform_6(%arg0: i32) -> (i32, i32) {
    %c0_i32 = arith.constant 0 : i32
    %c0_i32_0 = arith.constant 0 : i32
    %c0_i32_1 = arith.constant 0 : i32
    return %c0_i32, %c0_i32_0 : i32, i32
  }
  func.func @transform_7(%arg0: i32) -> (i32, i32) {
    %c0_i32 = arith.constant 0 : i32
    %c0_i32_0 = arith.constant 0 : i32
    return %arg0, %c0_i32 : i32, i32
  }
}

</mosaic_0001>

<llo_original>
// kernel: tpu_custom_call.1
$region0: #{tpu_custom_call.1}
  #allocation0 [shape = 'u32[]', space=smem, size = 0x4, offset = 0x4, fixed_abs, tag = 'smem constant byte address 0x4 - core index']
  #allocation1 [shape = 'u32[144,128]{1,0:T(1,128)}', space=vmem, size = 0x12000, scoped, tag = 'internal scratch']
  %s0 = inlined_call_operand.hbm [shape: f32[8,12], index: 0, kind: input, shape index: {}]
  %s1 = inlined_call_operand.vmem [shape: f32[12,64], index: 1, kind: input, shape index: {}]
  %s2 = inlined_call_operand.vmem [shape: f32[1,64], index: 2, kind: input, shape index: {}]
  %s3 = inlined_call_operand.vmem [shape: f32[64,64], index: 3, kind: input, shape index: {}]
  %s4 = inlined_call_operand.vmem [shape: f32[1,64], index: 4, kind: input, shape index: {}]
  %s5 = inlined_call_operand.vmem [shape: f32[64,8], index: 5, kind: input, shape index: {}]
  %s6 = inlined_call_operand.vmem [shape: f32[1,8], index: 6, kind: input, shape index: {}]
  %s7 = inlined_call_operand.hbm [shape: f32[8,8], index: 7, kind: output, shape index: {}]
  %s8 = sld [smem:[#allocation0]]
  $region42: #{tpu_custom_call.1} parent=0
    _
  %s10 = ssub.s32 1, %s8
  %s11 = scalar_select 0, %s10, %s8
  $region1: #{tpu_custom_call.1} parent=0
    #allocation2 [shape = 'u8[4096]{0}', space=vmem, size = 0x1000, scoped, tag = 'input window, operand 0, single buffered']
    #allocation3 [shape = 's32[1]{0}', space=sflag, size = 0x4, scoped, tag = 'scoped memory for tpu_custom_call.1']
    #allocation4 [shape = 's32[1]{0}', space=sflag, size = 0x4, scoped, tag = 'scoped memory for tpu_custom_call.1']
    #allocation5 [shape = 'u8[4096]{0}', space=vmem, size = 0x1000, scoped, tag = 'output window, operand 0, single buffered']
    %12 = vsyncpa [#allocation3], 0
    %13 = vsyncpa [#allocation4], 0
    // Predicated region
    $region2: #{tpu_custom_call.1} parent=1 // pred_check
      _
    $region3: #{tpu_custom_call.1} parent=1 // pred_check_branch
      %15 = sbr.rel (0) target = $region5
    $region4: #{tpu_custom_call.1} parent=1 // pred_region
      %s17 = ssub.s32 128, 128
      %18 = vsyncadd [#allocation3], %s17
      %s20 = sshll.u32 [#allocation2], 4
      %s21 = int_to_ptr.vmem [resolvable:$true] %s20
      %23 = dma.hbm_to_vmem [thread:$0]  %s0, 128, %s21, [#allocation3]
    $region5: #{tpu_custom_call.1} parent=1 // pred_fallthru
      _
    // Predicated region
    $region6: #{tpu_custom_call.1} parent=1 // pred_check
      _
    $region7: #{tpu_custom_call.1} parent=1 // pred_check_branch
      %25 = sbr.rel (0) target = $region9
    $region8: #{tpu_custom_call.1} parent=1 // pred_region
      _
    $region9: #{tpu_custom_call.1} parent=1 // pred_fallthru
      _
    // Predicated region
    $region10: #{tpu_custom_call.1} parent=1 // pred_check
      _
    $region11: #{tpu_custom_call.1} parent=1 // pred_check_branch
      %27 = sbr.rel (0) target = $region13
    $region12: #{tpu_custom_call.1} parent=1 // pred_region
      _
    $region13: #{tpu_custom_call.1} parent=1 // pred_fallthru
      _
    // Predicated region
    $region14: #{tpu_custom_call.1} parent=1 // pred_check
      _
    $region15: #{tpu_custom_call.1} parent=1 // pred_check_branch
      %29 = sbr.rel (0) target = $region17
    $region16: #{tpu_custom_call.1} parent=1 // pred_region
      _
    $region17: #{tpu_custom_call.1} parent=1 // pred_fallthru
      _
    // Predicated region
    $region18: #{tpu_custom_call.1} parent=1 // pred_check
      _
    $region19: #{tpu_custom_call.1} parent=1 // pred_check_branch
      %31 = sbr.rel (0) target = $region21
    $region20: #{tpu_custom_call.1} parent=1 // pred_region
      _
    $region21: #{tpu_custom_call.1} parent=1 // pred_fallthru
      _
    // Predicated region
    $region22: #{tpu_custom_call.1} parent=1 // pred_check
      _
    $region23: #{tpu_custom_call.1} parent=1 // pred_check_branch
      %33 = sbr.rel (0) target = $region25
    $region24: #{tpu_custom_call.1} parent=1 // pred_region
      _
    $region25: #{tpu_custom_call.1} parent=1 // pred_fallthru
      _
    // Predicated region
    $region26: #{tpu_custom_call.1} parent=1 // pred_check
      _
    $region27: #{tpu_custom_call.1} parent=1 // pred_check_branch
      %35 = sbr.rel (0) target = $region29
    $region28: #{tpu_custom_call.1} parent=1 // pred_region
      _
    $region29: #{tpu_custom_call.1} parent=1 // pred_fallthru
      _
    // Predicated region
    $region30: #{tpu_custom_call.1} parent=1 // pred_check
      _
    $region31: #{tpu_custom_call.1} parent=1 // pred_check_branch
      %37 = sbr.rel (0) target = $region33
    $region32: #{tpu_custom_call.1} parent=1 // pred_region
      %38 = dma.done [#allocation3], 128
    $region33: #{tpu_custom_call.1} parent=1 // pred_fallthru
      _
    %v39 = vld [vmem:[#allocation2] sm:$0xff]
    %v40 = vld [vmem:[%s1] sm:$0xff]
    %v41 = vld [vmem:[%s1 + $0x8] sm:$0xf]
    %v42 = vld [vmem:[%s2] sm:$0x1]
    %v44 = vlaneseq
    %v45 = vshrl.u32 %v44, 7
    %v46 = vsub.s32 0, %v45
    %v47 = vrot.slane %v42, %v46
    %vm49 = vcmask 97280
    %v51 = vsel %vm49, %v39, 0
    %vm53 = vcmask 1043456
    %v55 = vsel %vm53, %v41, 0
    %57 = vmatprep.subr.mxu0 0.0
    %58 = vmatpush1.msra.mxu0 %v40
    %59 = vmatprep.subr.mxu0 0.0
    %60 = vmatpush1.msra.mxu0 %v55
    %61 = vmatprep.subr.mxu0 0.0
    %62 = vmatpush1.msra.mxu0 0.0
    %63 = vmatprep.subr.mxu0 0.0
    %64 = vmatpush1.msra.mxu0 0.0
    %65 = vmatprep.subr.mxu0 0.0
    %66 = vmatpush1.msra.mxu0 0.0
    %67 = vmatprep.subr.mxu0 0.0
    %68 = vmatpush1.msra.mxu0 0.0
    %69 = vmatprep.subr.mxu0 0.0
    %70 = vmatpush1.msra.mxu0 0.0
    %71 = vmatprep.subr.mxu0 0.0
    %72 = vmatpush1.msra.mxu0 0.0
    %73 = vmatprep.subr.mxu0 0.0
    %74 = vmatpush1.msra.mxu0 0.0
    %75 = vmatprep.subr.mxu0 0.0
    %76 = vmatpush1.msra.mxu0 0.0
    %77 = vmatprep.subr.mxu0 0.0
    %78 = vmatpush1.msra.mxu0 0.0
    %79 = vmatprep.subr.mxu0 0.0
    %80 = vmatpush1.msra.mxu0 0.0
    %81 = vmatprep.subr.mxu0 0.0
    %82 = vmatpush1.msra.mxu0 0.0
    %83 = vmatprep.subr.mxu0 0.0
    %84 = vmatpush1.msra.mxu0 0.0
    %85 = vmatprep.subr.mxu0 0.0
    %86 = vmatpush1.msra.mxu0 0.0
    %87 = vmatprep.subr.mxu0 0.0
    %88 = vmatpush1.msra.mxu0 0.0
    %89 = vmatprep.subr.mxu0 0.0
    %90 = vmatpush1.msra.mxu0 0.0
    %91 = vmatprep.subr.mxu0 0.0
    %92 = vmatpush1.msra.mxu0 0.0
    %93 = vmatprep.subr.mxu0 0.0
    %94 = vmatpush1.msra.mxu0 0.0
    %95 = vmatprep.subr.mxu0 0.0
    %96 = vmatpush1.msra.mxu0 0.0
    %97 = vmatprep.subr.mxu0 0.0
    %98 = vmatpush1.msra.mxu0 0.0
    %99 = vmatprep.subr.mxu0 0.0
    %100 = vmatpush1.msra.mxu0 0.0
    %101 = vmatprep.subr.mxu0 0.0
    %102 = vmatpush1.msra.mxu0 0.0
    %103 = vmatprep.subr.mxu0 0.0
    %104 = vmatpush1.msra.mxu0 0.0
    %105 = vmatprep.subr.mxu0 0.0
    %106 = vmatpush1.msra.mxu0 0.0
    %107 = vmatprep.subr.mxu0 0.0
    %108 = vmatpush1.msra.mxu0 0.0
    %109 = vmatprep.subr.mxu0 0.0
    %110 = vmatpush1.msra.mxu0 0.0
    %111 = vmatprep.subr.mxu0 0.0
    %112 = vmatpush1.msra.mxu0 0.0
    %113 = vmatprep.subr.mxu0 0.0
    %114 = vmatpush1.msra.mxu0 0.0
    %115 = vmatprep.subr.mxu0 0.0
    %116 = vmatpush1.msra.mxu0 0.0
    %117 = vmatprep.subr.mxu0 0.0
    %118 = vmatpush1.msra.mxu0 0.0
    %119 = vmatprep.subr.mxu0 0.0
    %120 = vmatpush1.msra.mxu0 0.0
    %121 = vmatprep.mubr.f32.mxu0 0.0
    %122 = vmatmul.mubr.f32.gmra.mrb[0].mxu0 %v51
    %v123 = vpop.f32.mrb[0].mxu0
    %v124 = vadd.f32 %v47, %v123
    %v125 = vpop.f32.mrb[0].mxu0
    %126 = vdwg.mxu0
    %v127 = vmax.f32 %v124, 0.0
    %v128 = vld [vmem:[%s3] sm:$0xff]
    %v129 = vld [vmem:[%s3 + $0x8] sm:$0xff]
    %v130 = vld [vmem:[%s3 + $0x10] sm:$0xff]
    %v131 = vld [vmem:[%s3 + $0x18] sm:$0xff]
    %v132 = vld [vmem:[%s3 + $0x20] sm:$0xff]
    %v133 = vld [vmem:[%s3 + $0x28] sm:$0xff]
    %v134 = vld [vmem:[%s3 + $0x30] sm:$0xff]
    %v135 = vld [vmem:[%s3 + $0x38] sm:$0xff]
    %v136 = vld [vmem:[%s4] sm:$0x1]
    %v138 = vlaneseq
    %v139 = vshrl.u32 %v138, 7
    %v140 = vsub.s32 0, %v139
    %v141 = vrot.slane %v136, %v140
    %vm143 = vcmask 523264
    %v145 = vsel %vm143, %v127, 0
    %147 = vmatprep.subr.mxu0 0.0
    %148 = vmatpush1.msra.mxu0 %v128
    %149 = vmatprep.subr.mxu0 0.0
    %150 = vmatpush1.msra.mxu0 %v129
    %151 = vmatprep.subr.mxu0 0.0
    %152 = vmatpush1.msra.mxu0 %v130
    %153 = vmatprep.subr.mxu0 0.0
    %154 = vmatpush1.msra.mxu0 %v131
    %155 = vmatprep.subr.mxu0 0.0
    %156 = vmatpush1.msra.mxu0 %v132
    %157 = vmatprep.subr.mxu0 0.0
    %158 = vmatpush1.msra.mxu0 %v133
    %159 = vmatprep.subr.mxu0 0.0
    %160 = vmatpush1.msra.mxu0 %v134
    %161 = vmatprep.subr.mxu0 0.0
    %162 = vmatpush1.msra.mxu0 %v135
    %163 = vmatprep.subr.mxu0 0.0
    %164 = vmatpush1.msra.mxu0 0.0
    %165 = vmatprep.subr.mxu0 0.0
    %166 = vmatpush1.msra.mxu0 0.0
    %167 = vmatprep.subr.mxu0 0.0
    %168 = vmatpush1.msra.mxu0 0.0
    %169 = vmatprep.subr.mxu0 0.0
    %170 = vmatpush1.msra.mxu0 0.0
    %171 = vmatprep.subr.mxu0 0.0
    %172 = vmatpush1.msra.mxu0 0.0
    %173 = vmatprep.subr.mxu0 0.0
    %174 = vmatpush1.msra.mxu0 0.0
    %175 = vmatprep.subr.mxu0 0.0
    %176 = vmatpush1.msra.mxu0 0.0
    %177 = vmatprep.subr.mxu0 0.0
    %178 = vmatpush1.msra.mxu0 0.0
    %179 = vmatprep.subr.mxu0 0.0
    %180 = vmatpush1.msra.mxu0 0.0
    %181 = vmatprep.subr.mxu0 0.0
    %182 = vmatpush1.msra.mxu0 0.0
    %183 = vmatprep.subr.mxu0 0.0
    %184 = vmatpush1.msra.mxu0 0.0
    %185 = vmatprep.subr.mxu0 0.0
    %186 = vmatpush1.msra.mxu0 0.0
    %187 = vmatprep.subr.mxu0 0.0
    %188 = vmatpush1.msra.mxu0 0.0
    %189 = vmatprep.subr.mxu0 0.0
    %190 = vmatpush1.msra.mxu0 0.0
    %191 = vmatprep.subr.mxu0 0.0
    %192 = vmatpush1.msra.mxu0 0.0
    %193 = vmatprep.subr.mxu0 0.0
    %194 = vmatpush1.msra.mxu0 0.0
    %195 = vmatprep.subr.mxu0 0.0
    %196 = vmatpush1.msra.mxu0 0.0
    %197 = vmatprep.subr.mxu0 0.0
    %198 = vmatpush1.msra.mxu0 0.0
    %199 = vmatprep.subr.mxu0 0.0
    %200 = vmatpush1.msra.mxu0 0.0
    %201 = vmatprep.subr.mxu0 0.0
    %202 = vmatpush1.msra.mxu0 0.0
    %203 = vmatprep.subr.mxu0 0.0
    %204 = vmatpush1.msra.mxu0 0.0
    %205 = vmatprep.subr.mxu0 0.0
    %206 = vmatpush1.msra.mxu0 0.0
    %207 = vmatprep.subr.mxu0 0.0
    %208 = vmatpush1.msra.mxu0 0.0
    %209 = vmatprep.subr.mxu0 0.0
    %210 = vmatpush1.msra.mxu0 0.0
    %211 = vmatprep.mubr.f32.mxu0 0.0
    %212 = vmatmul.mubr.f32.gmra.mrb[0].mxu0 %v145
    %v213 = vpop.f32.mrb[0].mxu0
    %v214 = vadd.f32 %v141, %v213
    %v215 = vpop.f32.mrb[0].mxu0
    %216 = vdwg.mxu0
    %v217 = vmax.f32 %v214, 0.0
    %v218 = vld [vmem:[%s5] sm:$0xff]
    %v219 = vld [vmem:[%s5 + $0x8] sm:$0xff]
    %v220 = vld [vmem:[%s5 + $0x10] sm:$0xff]
    %v221 = vld [vmem:[%s5 + $0x18] sm:$0xff]
    %v222 = vld [vmem:[%s5 + $0x20] sm:$0xff]
    %v223 = vld [vmem:[%s5 + $0x28] sm:$0xff]
    %v224 = vld [vmem:[%s5 + $0x30] sm:$0xff]
    %v225 = vld [vmem:[%s5 + $0x38] sm:$0xff]
    %v226 = vld [vmem:[%s6] sm:$0x1]
    %v228 = vlaneseq
    %v229 = vshrl.u32 %v228, 7
    %v230 = vsub.s32 0, %v229
    %v231 = vrot.slane %v226, %v230
    %v234 = vsel %vm143, %v217, 0
    %236 = vmatprep.subr.mxu0 0.0
    %237 = vmatpush1.msra.mxu0 %v218
    %238 = vmatprep.subr.mxu0 0.0
    %239 = vmatpush1.msra.mxu0 %v219
    %240 = vmatprep.subr.mxu0 0.0
    %241 = vmatpush1.msra.mxu0 %v220
    %242 = vmatprep.subr.mxu0 0.0
    %243 = vmatpush1.msra.mxu0 %v221
    %244 = vmatprep.subr.mxu0 0.0
    %245 = vmatpush1.msra.mxu0 %v222
    %246 = vmatprep.subr.mxu0 0.0
    %247 = vmatpush1.msra.mxu0 %v223
    %248 = vmatprep.subr.mxu0 0.0
    %249 = vmatpush1.msra.mxu0 %v224
    %250 = vmatprep.subr.mxu0 0.0
    %251 = vmatpush1.msra.mxu0 %v225
    %252 = vmatprep.subr.mxu0 0.0
    %253 = vmatpush1.msra.mxu0 0.0
    %254 = vmatprep.subr.mxu0 0.0
    %255 = vmatpush1.msra.mxu0 0.0
    %256 = vmatprep.subr.mxu0 0.0
    %257 = vmatpush1.msra.mxu0 0.0
    %258 = vmatprep.subr.mxu0 0.0
    %259 = vmatpush1.msra.mxu0 0.0
    %260 = vmatprep.subr.mxu0 0.0
    %261 = vmatpush1.msra.mxu0 0.0
    %262 = vmatprep.subr.mxu0 0.0
    %263 = vmatpush1.msra.mxu0 0.0
    %264 = vmatprep.subr.mxu0 0.0
    %265 = vmatpush1.msra.mxu0 0.0
    %266 = vmatprep.subr.mxu0 0.0
    %267 = vmatpush1.msra.mxu0 0.0
    %268 = vmatprep.subr.mxu0 0.0
    %269 = vmatpush1.msra.mxu0 0.0
    %270 = vmatprep.subr.mxu0 0.0
    %271 = vmatpush1.msra.mxu0 0.0
    %272 = vmatprep.subr.mxu0 0.0
    %273 = vmatpush1.msra.mxu0 0.0
    %274 = vmatprep.subr.mxu0 0.0
    %275 = vmatpush1.msra.mxu0 0.0
    %276 = vmatprep.subr.mxu0 0.0
    %277 = vmatpush1.msra.mxu0 0.0
    %278 = vmatprep.subr.mxu0 0.0
    %279 = vmatpush1.msra.mxu0 0.0
    %280 = vmatprep.subr.mxu0 0.0
    %281 = vmatpush1.msra.mxu0 0.0
    %282 = vmatprep.subr.mxu0 0.0
    %283 = vmatpush1.msra.mxu0 0.0
    %284 = vmatprep.subr.mxu0 0.0
    %285 = vmatpush1.msra.mxu0 0.0
    %286 = vmatprep.subr.mxu0 0.0
    %287 = vmatpush1.msra.mxu0 0.0
    %288 = vmatprep.subr.mxu0 0.0
    %289 = vmatpush1.msra.mxu0 0.0
    %290 = vmatprep.subr.mxu0 0.0
    %291 = vmatpush1.msra.mxu0 0.0
    %292 = vmatprep.subr.mxu0 0.0
    %293 = vmatpush1.msra.mxu0 0.0
    %294 = vmatprep.subr.mxu0 0.0
    %295 = vmatpush1.msra.mxu0 0.0
    %296 = vmatprep.subr.mxu0 0.0
    %297 = vmatpush1.msra.mxu0 0.0
    %298 = vmatprep.subr.mxu0 0.0
    %299 = vmatpush1.msra.mxu0 0.0
    %300 = vmatprep.mubr.f32.mxu0 0.0
    %301 = vmatmul.mubr.f32.gmra.mrb[0].mxu0 %v234
    %v302 = vpop.f32.mrb[0].mxu0
    %v303 = vadd.f32 %v231, %v302
    %v304 = vpop.f32.mrb[0].mxu0
    %305 = vdwg.mxu0
    %vm306 = vcmask 64512
    %307 = vst.msk [vmem:[#allocation5] sm:$0xff] %vm306, %v303
    // Predicated region
    $region34: #{tpu_custom_call.1} parent=1 // pred_check
      _
    $region35: #{tpu_custom_call.1} parent=1 // pred_check_branch
      %309 = sbr.rel (0) target = $region37
    $region36: #{tpu_custom_call.1} parent=1 // pred_region
      %s311 = ssub.s32 128, 128
      %312 = vsyncadd [#allocation4], %s311
      %s314 = sshll.u32 [#allocation5], 4
      %s315 = int_to_ptr.vmem [resolvable:$true] %s314
      %317 = dma.vmem_to_hbm [thread:$0]  %s315, 128, %s7, [#allocation4]
    $region37: #{tpu_custom_call.1} parent=1 // pred_fallthru
      _
    // Predicated region
    $region38: #{tpu_custom_call.1} parent=1 // pred_check
      _
    $region39: #{tpu_custom_call.1} parent=1 // pred_check_branch
      %319 = sbr.rel (0) target = $region41
    $region40: #{tpu_custom_call.1} parent=1 // pred_region
      %320 = dma.done [#allocation4], 128
    $region41: #{tpu_custom_call.1} parent=1 // pred_fallthru
      _
    %321 = vsyncpa [#allocation3], 1
    %322 = vsyncpa [#allocation4], 1

</llo_original>
